<compile_context>
chip_gen: v6e
topology: v6e:2x2x1
jax: 0.10.0
libtpu: 0.0.40
codegen_flags: <defaults>
</compile_context>

<pallas_src>
import functools

import jax
import jax.numpy as jnp
from jax import lax
from jax.experimental import pallas as pl
from jax.experimental.pallas import tpu as pltpu


def _round_up(x: int, m: int) -> int:
    return ((x + m - 1) // m) * m


def _pick_tk(k_pad: int, tk_target: int) -> int:
    """Largest K tile dividing k_pad: the full dim, else a multiple of 128."""
    if k_pad <= tk_target:
        return k_pad
    cap = (min(k_pad, tk_target) // 128) * 128
    for cand in range(cap, 0, -128):
        if k_pad % cand == 0:
            return cand
    return k_pad  # fallback: one full-K block (always a legal block shape)


def _pick_tn(n_pad: int, tn_target: int) -> int:
    """N tile: full dim for small heads, else a multiple-of-128 divisor."""
    if n_pad <= tn_target:
        return n_pad
    cap = (min(n_pad, tn_target) // 128) * 128
    for cand in range(cap, 0, -128):
        if n_pad % cand == 0:
            return cand
    return n_pad  # fallback: one full-N tile (always legal)


def _pad_and_cast_params(weight, bias, tn_target: int):
    """Pad N/K to tile-friendly sizes and cast the weight stream to bf16."""
    n, k = weight.shape
    k_pad = _round_up(k, 128)
    n16 = _round_up(n, 16)
    # Small heads: pad only to the bf16 sublane quantum (16) so HBM weight
    # bytes are not inflated; big heads: pad to 128 so 128-multiple N tiles
    # keep the output/bias lane dim legal and dense.
    n_pad = n16 if n16 <= tn_target else _round_up(n, 128)
    if (n_pad, k_pad) != (n, k):
        weight = jnp.pad(weight, ((0, n_pad - n), (0, k_pad - k)))
    if n_pad != n:
        bias = jnp.pad(bias, (0, n_pad - n))
    return weight.astype(jnp.bfloat16), bias.astype(jnp.float32)


def prepare_fc_params(weight, bias, *, tn_target: int = 256):
    """One-time parameter prep. Call OUTSIDE jit so the weight pad/cast copy
    never appears in the per-forward hot path (the key HBM-traffic fix)."""
    return _pad_and_cast_params(jnp.asarray(weight), jnp.asarray(bias), tn_target)


def _needs_prep(weight, tn_target: int) -> bool:
    n, k = weight.shape
    return (weight.dtype != jnp.bfloat16
            or k % 128 != 0
            or n % 16 != 0
            or (n > tn_target and n % 128 != 0))


def _fc_kernel(x_ref, w_ref, b_ref, o_ref):
    # x_ref: (B, TK) bf16      w_ref: (TN, TK) bf16  (PyTorch (N, K) layout)
    # b_ref: (1, TN) f32       o_ref: (1, B, TN) f32, resident over the K axis
    s = pl.program_id(0)    # K-split index ("parallel": both v7x TCs work)
    kk = pl.program_id(2)   # K step within this split ("arbitrary" reduction)

    @pl.when(kk == 0)
    def _init():
        # Fold the bias into the accumulator init.  Only split 0 carries it,
        # so the cross-split sum in the wrapper adds it exactly once.
        gate = (s == 0).astype(jnp.float32)
        o_ref[...] = jnp.broadcast_to(
            b_ref[...].astype(jnp.float32) * gate, o_ref.shape)

    # Contract the shared, lane-dense last (K) dim of both tiles on the MXU,
    # accumulating in f32 directly in the resident output block.
    # TODO(synk): confirm via bundle dump that this trans-B contraction lowers
    # to a native transposed MXU push (no per-step XLU transpose of the 4 MiB
    # weight tile) — hidden under DMA on v5e/v6e, potentially visible on v7x.
    o_ref[...] += lax.dot_general(
        x_ref[...], w_ref[...],
        dimension_numbers=(((1,), (1,)), ((), ())),
        preferred_element_type=jnp.float32,
    )[None]


@functools.partial(
    jax.jit,
    static_argnames=("num_classes", "tk_target", "tn_target", "k_splits"))
def fine_clf_fc_layer(x, weight, bias, *, num_classes,
                      tk_target=16384, tn_target=256, k_splits=2):
    """y = flatten(x) @ weight.T + bias  (PyTorch nn.Linear semantics).

    x      : (B, in_ftrs, in_ftrs) float32  (all non-batch dims are flattened)
    weight : preferably the bf16 (n_pad, k_pad) array from prepare_fc_params;
             a raw f32 (N, K) PyTorch weight also works (slow in-jit prep).
    bias   : matching (n_pad,) f32 (or raw (N,)).
    returns: (B, num_classes) float32
    """
    b = x.shape[0]
    x_flat = x.reshape(b, -1).astype(jnp.bfloat16)   # the .view() + bf16 cast
    k = x_flat.shape[1]

    if _needs_prep(weight, tn_target):
        # Slow path: per-call pad + cast of the full weight.  Prefer calling
        # prepare_fc_params() once outside jit (avoids an extra HBM copy of
        # the weight on every forward).
        weight, bias = _pad_and_cast_params(weight, bias, tn_target)

    n_pad, k_pad = weight.shape
    if k_pad != k:
        # x is tiny (B x K); zero-pad its K so no ragged tail enters the dot.
        x_flat = jnp.pad(x_flat, ((0, 0), (0, k_pad - k)))
    bias_2d = bias.reshape(1, n_pad).astype(jnp.float32)

    tk = _pick_tk(k_pad, tk_target)
    tn = _pick_tn(n_pad, tn_target)
    k_tiles = k_pad // tk
    n_tiles = n_pad // tn

    # v7x: split the K range across the two TensorCores via a leading
    # "parallel" axis (small heads often have n_tiles == 1).  Total grid steps
    # are unchanged, so on single-TC v5e/v6e this is free.
    ks = k_splits if (k_splits > 1 and k_tiles % k_splits == 0) else 1
    kt_split = k_tiles // ks
    grid = (ks, n_tiles, kt_split)

    # Double-buffered VMEM footprint (bf16 weight stream dominates).  Clamp to
    # stay well inside v7x's 64 MiB physical VMEM.
    vmem_need = (2 * tn * tk * 2      # weight tiles, double-buffered, bf16
                 + 2 * b * tk * 2     # x tiles, double-buffered, bf16
                 + 2 * b * tn * 4     # resident output block (+ writeback buf)
                 + 2 * tn * 4)        # bias block
    vmem_limit = max(32 * 1024 * 1024, min(vmem_need + (8 << 20), 56 << 20))

    cost = pl.CostEstimate(
        flops=2 * b * k_pad * n_pad,
        transcendentals=0,
        bytes_accessed=(n_pad * k_pad * 2           # weight, read once
                        + n_tiles * b * k_pad * 2   # x, re-read per N tile
                        + ks * b * n_pad * 4        # partial outputs
                        + n_pad * 4),
    )

    out = pl.pallas_call(
        _fc_kernel,
        out_shape=jax.ShapeDtypeStruct((ks, b, n_pad), jnp.float32),
        grid_spec=pltpu.PrefetchScalarGridSpec(
            num_scalar_prefetch=0,
            grid=grid,
            in_specs=[
                # x: streamed over K (split-aware), re-used across N tiles.
                pl.BlockSpec((b, tk), lambda s, j, kk: (0, s * kt_split + kk)),
                # weight: PyTorch (N, K) layout, K lane-dense, streamed over K.
                pl.BlockSpec((tn, tk), lambda s, j, kk: (j, s * kt_split + kk)),
                # bias: block index constant over K -> fetched once per (s, j).
                pl.BlockSpec((1, tn), lambda s, j, kk: (0, j)),
            ],
            out_specs=pl.BlockSpec((1, b, tn), lambda s, j, kk: (s, 0, j)),
        ),
        compiler_params=pltpu.CompilerParams(
            dimension_semantics=("parallel", "parallel", "arbitrary"),
            vmem_limit_bytes=vmem_limit,
        ),
        cost_estimate=cost,
    )(x_flat, weight, bias_2d)

    y = out[0] if ks == 1 else jnp.sum(out, axis=0)
    return y[:, :num_classes]


if __name__ == "__main__":
    # Small synthetic shapes consistent with the module's forward pass.
    batch = 2
    in_ftrs = 16          # reference module uses 512; small here for the demo
    num_classes = 8
    k_feats = in_ftrs ** 2

    key = jax.random.PRNGKey(0)
    kx, kw, kb = jax.random.split(key, 3)

    x = jax.random.normal(kx, (batch, in_ftrs, in_ftrs), dtype=jnp.float32)
    # Deterministic nn.Linear-style init (uniform(-1/sqrt(K), 1/sqrt(K))).
    bound = 1.0 / (k_feats ** 0.5)
    weight = jax.random.uniform(kw, (num_classes, k_feats), jnp.float32,
                                minval=-bound, maxval=bound)
    bias = jax.random.uniform(kb, (num_classes,), jnp.float32,
                              minval=-bound, maxval=bound)

    # References: same bf16 input quantization / f32 accumulation, plus the
    # original pure-f32 module output (loose tolerance for the bf16 stream).
    x_flat = x.reshape(batch, k_feats)
    w_bf = weight.astype(jnp.bfloat16).astype(jnp.float32)
    x_bf = x_flat.astype(jnp.bfloat16).astype(jnp.float32)
    y_ref_bf16 = x_bf @ w_bf.T + bias
    y_ref_f32 = x_flat @ weight.T + bias

    # One-time parameter prep (outside the jitted hot path).
    w_prep, b_prep = prepare_fc_params(weight, bias)

    # 1) Default path (single K tile, single split at this small shape).
    y = fine_clf_fc_layer(x, w_prep, b_prep, num_classes=num_classes)
    jax.block_until_ready(y)
    assert y.shape == (batch, num_classes)
    assert jnp.allclose(y, y_ref_bf16, atol=1e-3, rtol=1e-3)
    assert jnp.allclose(y, y_ref_f32, atol=5e-2, rtol=5e-2)

    # 2) Multi-K-tile + dual K-split (v7x dual-core) path with tiny tiles.
    y2 = fine_clf_fc_layer(x, w_prep, b_prep, num_classes=num_classes,
                           tk_target=128, k_splits=2)
    jax.block_until_ready(y2)
    assert jnp.allclose(y2, y_ref_bf16, atol=1e-3, rtol=1e-3)

    # 3) Raw f32 PyTorch-layout params (exercises the documented slow fallback).
    y3 = fine_clf_fc_layer(x, weight, bias, num_classes=num_classes)
    jax.block_until_ready(y3)
    assert jnp.allclose(y3, y, atol=1e-5, rtol=1e-5)

    print("KERNEL_OK")
</pallas_src>

<mosaic_0001>
module attributes {stable_mosaic.version = 11 : i64} {
  func.func @_fc_kernel(%arg0: i32, %arg1: i32, %arg2: i32, %arg3: memref<2x256xbf16, #tpu.memory_space<vmem>>, %arg4: memref<16x256xbf16, #tpu.memory_space<vmem>>, %arg5: memref<1x16xf32, #tpu.memory_space<vmem>>, %arg6: memref<1x2x16xf32, #tpu.memory_space<vmem>>) attributes {dimension_semantics = [#tpu.dimension_semantics<parallel>, #tpu.dimension_semantics<parallel>, #tpu.dimension_semantics<arbitrary>], iteration_bounds = array<i64: 1, 1, 1>, scalar_prefetch = 0 : i64, scratch_operands = 0 : i64, tpu.core_type = #tpu.core_type<tc>, window_params = [{transform_indices = @transform_0, window_bounds = array<i64: 2, 256>}, {transform_indices = @transform_1, window_bounds = array<i64: 16, 256>}, {transform_indices = @transform_2, window_bounds = array<i64: 1, 16>}, {transform_indices = @transform_3, window_bounds = array<i64: 1, 2, 16>}]} {
    %c0_i32 = arith.constant 0 : i32
    %0 = arith.cmpi eq, %arg2, %c0_i32 : i32
    %1 = arith.extui %0 : i1 to i32
    %c0_i32_0 = arith.constant 0 : i32
    %2 = arith.cmpi ne, %1, %c0_i32_0 : i32
    scf.if %2 {
      %c0_i32_10 = arith.constant 0 : i32
      %10 = arith.cmpi eq, %arg0, %c0_i32_10 : i32
      %11 = arith.extui %10 : i1 to i32
      %12 = arith.sitofp %11 : i32 to f32
      %c0_11 = arith.constant 0 : index
      %c0_12 = arith.constant 0 : index
      %13 = vector.load %arg5[%c0_11, %c0_12] : memref<1x16xf32, #tpu.memory_space<vmem>>, vector<1x16xf32>
      %14 = vector.broadcast %12 : f32 to vector<1x16xf32>
      %15 = arith.mulf %13, %14 : vector<1x16xf32>
      %16 = vector.shape_cast %15 : vector<1x16xf32> to vector<1x1x16xf32>
      %17 = vector.broadcast %16 : vector<1x1x16xf32> to vector<1x2x16xf32>
      %c0_13 = arith.constant 0 : index
      %c0_14 = arith.constant 0 : index
      %c0_15 = arith.constant 0 : index
      %18 = vector.load %arg6[%c0_13, %c0_14, %c0_15] : memref<1x2x16xf32, #tpu.memory_space<vmem>>, vector<1x2x16xf32>
      tpu.vector_store %arg6[%c0_13, %c0_14, %c0_15], %17 {strides = array<i32>} : memref<1x2x16xf32, #tpu.memory_space<vmem>>, vector<1x2x16xf32>,
    } else {
    }
    %c0 = arith.constant 0 : index
    %c0_1 = arith.constant 0 : index
    %c0_2 = arith.constant 0 : index
    %3 = vector.load %arg6[%c0, %c0_1, %c0_2] : memref<1x2x16xf32, #tpu.memory_space<vmem>>, vector<1x2x16xf32>
    %c0_3 = arith.constant 0 : index
    %c0_4 = arith.constant 0 : index
    %4 = vector.load %arg3[%c0_3, %c0_4] : memref<2x256xbf16, #tpu.memory_space<vmem>>, vector<2x256xbf16>
    %c0_5 = arith.constant 0 : index
    %c0_6 = arith.constant 0 : index
    %5 = vector.load %arg4[%c0_5, %c0_6] : memref<16x256xbf16, #tpu.memory_space<vmem>>, vector<16x256xbf16>
    %cst = arith.constant dense<0.000000e+00> : vector<2x16xf32>
    %6 = tpu.matmul %4, %5, %cst {dimension_numbers = #tpu.dot_dimension_numbers<[1], [1], [0], [0], [0, 0, 1, 0], [], []>} : vector<2x256xbf16>, vector<16x256xbf16>, vector<2x16xf32> -> vector<2x16xf32>
    %7 = vector.shape_cast %6 : vector<2x16xf32> to vector<1x2x16xf32>
    %8 = arith.addf %3, %7 : vector<1x2x16xf32>
    %c0_7 = arith.constant 0 : index
    %c0_8 = arith.constant 0 : index
    %c0_9 = arith.constant 0 : index
    %9 = vector.load %arg6[%c0_7, %c0_8, %c0_9] : memref<1x2x16xf32, #tpu.memory_space<vmem>>, vector<1x2x16xf32>
    tpu.vector_store %arg6[%c0_7, %c0_8, %c0_9], %8 {strides = array<i32>} : memref<1x2x16xf32, #tpu.memory_space<vmem>>, vector<1x2x16xf32>,
    return
  }
  func.func @transform_0(%arg0: i32, %arg1: i32, %arg2: i32) -> (i32, i32) {
    %c1_i32 = arith.constant 1 : i32
    %0 = arith.muli %arg0, %c1_i32 : i32
    %1 = arith.addi %0, %arg2 : i32
    %c0_i32 = arith.constant 0 : i32
    %c0_i32_0 = arith.constant 0 : i32
    return %c0_i32, %1 : i32, i32
  }
  func.func @transform_1(%arg0: i32, %arg1: i32, %arg2: i32) -> (i32, i32) {
    %c1_i32 = arith.constant 1 : i32
    %0 = arith.muli %arg0, %c1_i32 : i32
    %1 = arith.addi %0, %arg2 : i32
    %c0_i32 = arith.constant 0 : i32
    return %arg1, %1 : i32, i32
  }
  func.func @transform_2(%arg0: i32, %arg1: i32, %arg2: i32) -> (i32, i32) {
    %c0_i32 = arith.constant 0 : i32
    %c0_i32_0 = arith.constant 0 : i32
    return %c0_i32, %arg1 : i32, i32
  }
  func.func @transform_3(%arg0: i32, %arg1: i32, %arg2: i32) -> (i32, i32, i32) {
    %c0_i32 = arith.constant 0 : i32
    %c0_i32_0 = arith.constant 0 : i32
    return %arg0, %c0_i32, %arg1 : i32, i32, i32
  }
}

</mosaic_0001>

<llo_original>
// kernel: fine_clf_fc_layer.1
$region0: #{fine_clf_fc_layer.1}
  #allocation0 [shape = 'u32[]', space=smem, size = 0x4, offset = 0x4, fixed_abs, tag = 'smem constant byte address 0x4 - core index']
  #allocation1 [shape = 'u32[144,128]{1,0:T(1,128)}', space=vmem, size = 0x12000, scoped, tag = 'internal scratch']
  %s0 = inlined_call_operand.vmem [shape: bf16[2,256], index: 0, kind: input, shape index: {}]
  %s1 = inlined_call_operand.vmem [shape: bf16[16,256], index: 1, kind: input, shape index: {}]
  %s2 = inlined_call_operand.vmem [shape: f32[1,16], index: 2, kind: input, shape index: {}]
  %s3 = inlined_call_operand.hbm [shape: f32[1,2,16], index: 3, kind: output, shape index: {}]
  %s4 = sld [smem:[#allocation0]]
  $region26: #{fine_clf_fc_layer.1} parent=0
    _
  %s6 = ssub.s32 1, %s4
  %s7 = scalar_select 0, %s6, %s4
  $region1: #{fine_clf_fc_layer.1} parent=0
    #allocation2 [shape = 'u8[1024]{0}', space=vmem, size = 0x400, scoped, tag = 'output window, operand 0, single buffered']
    #allocation3 [shape = 's32[1]{0}', space=sflag, size = 0x4, scoped, tag = 'scoped memory for fine_clf_fc_layer.1']
    %8 = vsyncpa [#allocation3], 0
    // Predicated region
    $region2: #{fine_clf_fc_layer.1} parent=1 // pred_check
      _
    $region3: #{fine_clf_fc_layer.1} parent=1 // pred_check_branch
      %10 = sbr.rel (0) target = $region5
    $region4: #{fine_clf_fc_layer.1} parent=1 // pred_region
      %s11 = sadd.s32 0, 0
      %s12 = smul.u32 2, %s11
      %p13 = scmp.lt.s32.totalorder %s12, 1
      %s14 = scalar_select %p13, %s12, 1
      %s15 = scalar_lea.vmem %s0, %s14
      %s16 = sadd.s32 0, 0
      %s17 = smul.u32 2, %s16
    $region5: #{fine_clf_fc_layer.1} parent=1 // pred_fallthru
      _
    // Predicated region
    $region6: #{fine_clf_fc_layer.1} parent=1 // pred_check
      _
    $region7: #{fine_clf_fc_layer.1} parent=1 // pred_check_branch
      %19 = sbr.rel (0) target = $region9
    $region8: #{fine_clf_fc_layer.1} parent=1 // pred_region
      %s20 = sadd.s32 0, 0
      %s21 = smul.u32 2, %s20
      %p22 = scmp.lt.s32.totalorder %s21, 1
      %s23 = scalar_select %p22, %s21, 1
      %s24 = smul.addr %s23, 4
      %s25 = scalar_lea.vmem %s1, %s24
      %s26 = sadd.s32 0, 0
      %s27 = smul.u32 2, %s26
    $region9: #{fine_clf_fc_layer.1} parent=1 // pred_fallthru
      _
    // Predicated region
    $region10: #{fine_clf_fc_layer.1} parent=1 // pred_check
      _
    $region11: #{fine_clf_fc_layer.1} parent=1 // pred_check_branch
      %29 = sbr.rel (0) target = $region13
    $region12: #{fine_clf_fc_layer.1} parent=1 // pred_region
      _
    $region13: #{fine_clf_fc_layer.1} parent=1 // pred_fallthru
      _
    %s30 = sadd.s32 0, 0
    %s31 = smul.u32 2, %s30
    %p32 = scmp.lt.s32.totalorder %s31, 1
    %s33 = scalar_select %p32, %s31, 1
    %s34 = scalar_lea.vmem %s0, %s33
    %s35 = sadd.s32 0, 0
    %s36 = smul.u32 2, %s35
    %p37 = scmp.lt.s32.totalorder %s36, 1
    %s38 = scalar_select %p37, %s36, 1
    %s39 = smul.addr %s38, 4
    %s40 = scalar_lea.vmem %s1, %s39
    %s41 = sadd.s32 0, 0
    %s42 = smul.u32 2, %s41
    %p43 = scmp.lt.s32.totalorder %s42, 1
    %s44 = scalar_select %p43, %s42, 1
    %s45 = scalar_lea.vmem %s0, %s44
    %s46 = sadd.s32 0, 0
    %s47 = smul.u32 2, %s46
    %s48 = sadd.s32 0, 0
    %s49 = smul.u32 2, %s48
    %p50 = scmp.lt.s32.totalorder %s49, 1
    %s51 = scalar_select %p50, %s49, 1
    %s52 = smul.addr %s51, 4
    %s53 = scalar_lea.vmem %s1, %s52
    %s54 = sadd.s32 0, 0
    %s55 = smul.u32 2, %s54
    %p57 = scmp.eq.s32.totalorder 0, 0
    // Predicated region
    $region14: #{fine_clf_fc_layer.1} parent=1 // pred_check
      %p58 = pneg %p57
    $region15: #{fine_clf_fc_layer.1} parent=1 // pred_check_branch
      %60 = sbr.rel (%p58) target = $region17
    $region16: #{fine_clf_fc_layer.1} parent=1 // pred_region
      %p61 = scmp.eq.s32.totalorder 0, 0
      %s62 = scalar_select %p61, 1, 0
      %s63 = scvt.s32.f32 %s62
      %v64 = vld [vmem:[%s2] sm:$0x1]
      %v65 = vstv %s63
      %v66 = vmul.f32 %v64, %v65
      %v68 = vlaneseq
      %v69 = vshrl.u32 %v68, 7
      %v70 = vsub.s32 0, %v69
      %v71 = vrot.slane %v66, %v70
      %vm73 = vcmask 123904
      %74 = vst.msk [vmem:[#allocation2] sm:$0x3] %vm73, %v71
    $region17: #{fine_clf_fc_layer.1} parent=1 // pred_fallthru
      _
    %v75 = vld [vmem:[#allocation2] sm:$0x3]
    %v76 = vld [vmem:[%s45] sm:$0x3]
    %v77 = vld [vmem:[%s53] sm:$0xff]
    %v78 = vld [vmem:[%s53 + $0x8] sm:$0xff]
    %v81 = vunpack.c.l.s4 1966171168
    %v82 = vunpack.c.0.s8 %v81
    %v83 = vlaneseq
    %v84 = vshrl.u32 %v83, 7
    %v85 = vsub.s32 %v82, %v84
    %v86 = vrot.slane %v76, %v85
    %v87 = vcombine.high %v86, %v86
    %v89 = vunpack.c.l.s4 1966171168
    %v90 = vunpack.c.0.s8 %v89
    %v91 = vlaneseq
    %v92 = vshrl.u32 %v91, 7
    %v93 = vsub.s32 %v90, %v92
    %v94 = vrot.slane %v86, %v93
    %v96 = vunpack.c.l.s4 1966171168
    %v97 = vunpack.c.0.s8 %v96
    %v98 = vlaneseq
    %v99 = vshrl.u32 %v98, 7
    %v100 = vsub.s32 %v97, %v99
    %v101 = vrot.slane %v87, %v100
    %v106 = vunpack.c.l.b16 %v77
    %v107 = vunpack.c.h.b16 %v77
    %v108 = vunpack.c.l.b16 %v78
    %v109 = vunpack.c.h.b16 %v78
    %v110 = vpack.c.b16 %v108, %v106
    %v111 = vpack.c.b16 %v109, %v107
    %114 = vmatprep.subr.bf16.mxu0 0
    %115 = vmatpush1.bf16.xpose.msra.mxu0 0
    %116 = vmatprep.subr.bf16.mxu0 0
    %117 = vmatpush1.bf16.xpose.msra.mxu0 0
    %118 = vmatprep.subr.bf16.mxu0 0
    %119 = vmatpush1.bf16.xpose.msra.mxu0 0
    %120 = vmatprep.subr.bf16.mxu0 0
    %121 = vmatpush1.bf16.xpose.msra.mxu0 0
    %122 = vmatprep.subr.bf16.mxu0 0
    %123 = vmatpush1.bf16.xpose.msra.mxu0 0
    %124 = vmatprep.subr.bf16.mxu0 0
    %125 = vmatpush1.bf16.xpose.msra.mxu0 0
    %126 = vmatprep.subr.bf16.mxu0 0
    %127 = vmatpush1.bf16.xpose.msra.mxu0 0
    %128 = vmatprep.subr.bf16.mxu0 %v111
    %129 = vmatpush1.bf16.xpose.msra.mxu0 %v110
    %130 = vmatprep.subr.bf16.mxu0 0
    %131 = vmatpush2.bf16.xpose.msra.mxu0 0
    %132 = vmatprep.subr.bf16.mxu0 0
    %133 = vmatpush2.bf16.xpose.msra.mxu0 0
    %134 = vmatprep.subr.bf16.mxu0 0
    %135 = vmatpush2.bf16.xpose.msra.mxu0 0
    %136 = vmatprep.subr.bf16.mxu0 0
    %137 = vmatpush2.bf16.xpose.msra.mxu0 0
    %138 = vmatprep.subr.bf16.mxu0 0
    %139 = vmatpush2.bf16.xpose.msra.mxu0 0
    %140 = vmatprep.subr.bf16.mxu0 0
    %141 = vmatpush2.bf16.xpose.msra.mxu0 0
    %142 = vmatprep.subr.bf16.mxu0 0
    %143 = vmatpush2.bf16.xpose.msra.mxu0 0
    %144 = vmatprep.subr.bf16.mxu0 0
    %145 = vmatpush2.bf16.xpose.msra.mxu0 0
    %146 = vmatprep.mubr.bf16.mxu0 %v101
    %147 = vmatmul.mubr.bf16.gmra.mxu0 %v94
    %v148 = vpop.f32.mrf.mxu0
    %v149 = vadd.f32 0.0, %v148
    %v150 = vpop.f32.mrf.mxu0
    %v151 = vpop.f32.mrf.mxu0
    %v152 = vpop.f32.mrf.mxu0
    %153 = vdwg.mxu0
    %v154 = vadd.f32 %v75, %v149
    %vm155 = vcmask 123904
    %156 = vst.msk [vmem:[#allocation2] sm:$0x3] %vm155, %v154
    // Predicated region
    $region18: #{fine_clf_fc_layer.1} parent=1 // pred_check
      _
    $region19: #{fine_clf_fc_layer.1} parent=1 // pred_check_branch
      %158 = sbr.rel (0) target = $region21
    $region20: #{fine_clf_fc_layer.1} parent=1 // pred_region
      %s160 = ssub.s32 32, 32
      %161 = vsyncadd [#allocation3], %s160
      %s163 = sshll.u32 [#allocation2], 4
      %s164 = int_to_ptr.vmem [resolvable:$true] %s163
      %166 = dma.vmem_to_hbm [thread:$0]  %s164, 32, %s3, [#allocation3]
    $region21: #{fine_clf_fc_layer.1} parent=1 // pred_fallthru
      _
    // Predicated region
    $region22: #{fine_clf_fc_layer.1} parent=1 // pred_check
      _
    $region23: #{fine_clf_fc_layer.1} parent=1 // pred_check_branch
      %168 = sbr.rel (0) target = $region25
    $region24: #{fine_clf_fc_layer.1} parent=1 // pred_region
      %169 = dma.done [#allocation3], 32
    $region25: #{fine_clf_fc_layer.1} parent=1 // pred_fallthru
      _
    %170 = vsyncpa [#allocation3], 1

</llo_original>
